<compile_context>
chip_gen: v7x
topology: tpu7x:2x2x1
jax: 0.10.0
libtpu: 0.0.40
codegen_flags: <defaults>
</compile_context>

<pallas_src>
import functools

import jax
import jax.numpy as jnp
from jax import lax
from jax.experimental import pallas as pl
from jax.experimental.pallas import tpu as pltpu


_FEAT_IN = 21
_H1 = 128
_H2 = 64
_FEAT_OUT = 7
_OUT_PAD = 8  # final layer padded 7 -> 8 rows for the transposed (sublane) store


def _mlp_kernel(x_ref, w1_ref, b1_ref, w2_ref, b2_ref, w3t_ref, b3t_ref, o_ref):
    # x_ref: (TB, 21) tile streamed from HBM; all weights resident in VMEM.
    x = x_ref[...]

    # Layer 1: bf16 x / bf16 w1 into the MXU, f32 accumulation; bias+ReLU in f32.
    h1 = jnp.dot(x, w1_ref[...], preferred_element_type=jnp.float32) + b1_ref[...]
    h1 = jnp.maximum(h1, 0.0)                                   # (TB, 128) f32

    # Layer 2.
    h2 = jnp.dot(h1, w2_ref[...], preferred_element_type=jnp.float32) + b2_ref[...]
    h2 = jnp.maximum(h2, 0.0)                                   # (TB, 64) f32

    # Layer 3, computed transposed:  (8, 64) x (TB, 64)^T -> (8, TB).
    # Batch lands on the lane axis, so the output store is lane-dense instead of a
    # 7-lane masked vst.
    out_t = lax.dot_general(
        w3t_ref[...], h2,
        dimension_numbers=(((1,), (1,)), ((), ())),
        preferred_element_type=jnp.float32,
    ) + b3t_ref[...]                                            # (8, TB) f32

    o_ref[...] = out_t.astype(o_ref.dtype)


@functools.partial(jax.jit, static_argnames=("tb", "use_bf16"))
def siamese_simple_forward(x, params, *, tb=512, use_bf16=True):
    """Forward of SiameseNetworkSimple.fc. x: [B, 21] f32, params: w_i (in,out), b_i (1,out)."""
    b = x.shape[0]
    b_pad = pl.cdiv(b, tb) * tb

    in_dtype = jnp.bfloat16 if use_bf16 else jnp.float32
    x_p = jnp.pad(x.astype(jnp.float32), ((0, b_pad - b), (0, 0))).astype(in_dtype)

    w1 = params["w1"].astype(in_dtype)
    b1 = params["b1"].astype(jnp.float32)
    w2 = params["w2"].astype(jnp.float32)
    b2 = params["b2"].astype(jnp.float32)
    # Transposed + sublane-padded final layer: (out_pad=8, 64) and (8, 1).
    w3t = jnp.zeros((_OUT_PAD, _H2), jnp.float32).at[:_FEAT_OUT].set(params["w3"].T)
    b3t = jnp.zeros((_OUT_PAD, 1), jnp.float32).at[:_FEAT_OUT, 0].set(params["b3"][0])

    const = lambda i: (0, 0)  # weights/biases: same block every step -> stay resident

    out_t = pl.pallas_call(
        _mlp_kernel,
        out_shape=jax.ShapeDtypeStruct((_OUT_PAD, b_pad), jnp.float32),
        grid=(b_pad // tb,),
        in_specs=[
            pl.BlockSpec((tb, _FEAT_IN), lambda i: (i, 0)),   # x tile (pipelined)
            pl.BlockSpec((_FEAT_IN, _H1), const),             # w1
            pl.BlockSpec((1, _H1), const),                    # b1
            pl.BlockSpec((_H1, _H2), const),                  # w2
            pl.BlockSpec((1, _H2), const),                    # b2
            pl.BlockSpec((_OUT_PAD, _H2), const),             # w3^T (padded)
            pl.BlockSpec((_OUT_PAD, 1), const),               # b3^T (padded)
        ],
        out_specs=pl.BlockSpec((_OUT_PAD, tb), lambda i: (0, i)),
        compiler_params=pltpu.CompilerParams(
            dimension_semantics=("parallel",),  # shard batch axis across TCs on v7x
        ),
    )(x_p, w1, b1, w2, b2, w3t, b3t)

    # Drop the padded feature row / padded batch rows, back to [B, 7].
    return out_t[:_FEAT_OUT, :b].T


def siamese_simple_pair_forward(x1, x2, params, *, tb=512, use_bf16=True):
    """Both Siamese branches (shared weights) in a single fused kernel call."""
    xs = jnp.concatenate([x1, x2], axis=0)
    out = siamese_simple_forward(xs, params, tb=tb, use_bf16=use_bf16)
    return out[: x1.shape[0]], out[x1.shape[0]:]


def init_params(key):
    """Deterministic init mimicking nn.Linear's uniform(-1/sqrt(fan_in), +1/sqrt(fan_in))."""
    dims = [(_FEAT_IN, _H1), (_H1, _H2), (_H2, _FEAT_OUT)]
    params = {}
    for i, (fan_in, fan_out) in enumerate(dims, start=1):
        key, kw, kb = jax.random.split(key, 3)
        bound = 1.0 / jnp.sqrt(jnp.float32(fan_in))
        params[f"w{i}"] = jax.random.uniform(
            kw, (fan_in, fan_out), jnp.float32, minval=-bound, maxval=bound
        )
        params[f"b{i}"] = jax.random.uniform(
            kb, (1, fan_out), jnp.float32, minval=-bound, maxval=bound
        )
    return params


def reference_forward(x, params, use_bf16=True):
    """Pure-JAX reference mirroring the kernel's input/weight casts."""
    x = x.astype(jnp.float32)
    w1 = params["w1"]
    if use_bf16:
        x = x.astype(jnp.bfloat16).astype(jnp.float32)
        w1 = w1.astype(jnp.bfloat16).astype(jnp.float32)
    h1 = jnp.maximum(x @ w1 + params["b1"], 0.0)
    h2 = jnp.maximum(h1 @ params["w2"] + params["b2"], 0.0)
    return h2 @ params["w3"] + params["b3"]


if __name__ == "__main__":
    key = jax.random.PRNGKey(0)
    key, kx1, kx2 = jax.random.split(key, 3)
    params = init_params(key)

    batch = 8
    x = jax.random.normal(kx1, (batch, _FEAT_IN), jnp.float32)

    out = siamese_simple_forward(x, params)
    out = jax.block_until_ready(out)
    assert out.shape == (batch, _FEAT_OUT), out.shape

    ref = reference_forward(x, params)
    assert jnp.allclose(out, ref, atol=1e-2, rtol=1e-2), "mismatch vs JAX reference"

    # Siamese use case: both branches through one fused call with shared weights.
    x2 = jax.random.normal(kx2, (batch, _FEAT_IN), jnp.float32)
    o1, o2 = siamese_simple_pair_forward(x, x2, params)
    jax.block_until_ready((o1, o2))
    assert jnp.allclose(o1, ref, atol=1e-2, rtol=1e-2), "pair branch 1 mismatch"
    assert jnp.allclose(o2, reference_forward(x2, params), atol=1e-2, rtol=1e-2), "pair branch 2 mismatch"

    print("KERNEL_OK")
</pallas_src>

<mosaic_0001>
module attributes {stable_mosaic.version = 11 : i64} {
  func.func @_mlp_kernel(%arg0: i32, %arg1: memref<512x21xbf16, #tpu.memory_space<vmem>>, %arg2: memref<21x128xbf16, #tpu.memory_space<vmem>>, %arg3: memref<1x128xf32, #tpu.memory_space<vmem>>, %arg4: memref<128x64xf32, #tpu.memory_space<vmem>>, %arg5: memref<1x64xf32, #tpu.memory_space<vmem>>, %arg6: memref<8x64xf32, #tpu.memory_space<vmem>>, %arg7: memref<8x1xf32, #tpu.memory_space<vmem>>, %arg8: memref<8x512xf32, #tpu.memory_space<vmem>>) attributes {dimension_semantics = [#tpu.dimension_semantics<parallel>], iteration_bounds = array<i64: 1>, scalar_prefetch = 0 : i64, scratch_operands = 0 : i64, tpu.core_type = #tpu.core_type<tc>, window_params = [{transform_indices = @transform_0, window_bounds = array<i64: 512, 21>}, {pipeline_mode = #tpu.pipeline_mode<synchronous>, transform_indices = @transform_1, window_bounds = array<i64: 21, 128>}, {pipeline_mode = #tpu.pipeline_mode<synchronous>, transform_indices = @transform_2, window_bounds = array<i64: 1, 128>}, {pipeline_mode = #tpu.pipeline_mode<synchronous>, transform_indices = @transform_3, window_bounds = array<i64: 128, 64>}, {pipeline_mode = #tpu.pipeline_mode<synchronous>, transform_indices = @transform_4, window_bounds = array<i64: 1, 64>}, {pipeline_mode = #tpu.pipeline_mode<synchronous>, transform_indices = @transform_5, window_bounds = array<i64: 8, 64>}, {pipeline_mode = #tpu.pipeline_mode<synchronous>, transform_indices = @transform_6, window_bounds = array<i64: 8, 1>}, {transform_indices = @transform_7, window_bounds = array<i64: 8, 512>}]} {
    %c0 = arith.constant 0 : index
    %c0_0 = arith.constant 0 : index
    %0 = vector.load %arg1[%c0, %c0_0] : memref<512x21xbf16, #tpu.memory_space<vmem>>, vector<512x21xbf16>
    %c0_1 = arith.constant 0 : index
    %c0_2 = arith.constant 0 : index
    %1 = vector.load %arg2[%c0_1, %c0_2] : memref<21x128xbf16, #tpu.memory_space<vmem>>, vector<21x128xbf16>
    %cst = arith.constant dense<0.000000e+00> : vector<512x128xf32>
    %2 = tpu.matmul %0, %1, %cst {dimension_numbers = #tpu.dot_dimension_numbers<[1], [0], [0], [1], [0, 0, 1, 1], [], []>} : vector<512x21xbf16>, vector<21x128xbf16>, vector<512x128xf32> -> vector<512x128xf32>
    %c0_3 = arith.constant 0 : index
    %c0_4 = arith.constant 0 : index
    %3 = vector.load %arg3[%c0_3, %c0_4] : memref<1x128xf32, #tpu.memory_space<vmem>>, vector<1x128xf32>
    %4 = vector.broadcast %3 : vector<1x128xf32> to vector<512x128xf32>
    %5 = arith.addf %2, %4 : vector<512x128xf32>
    %cst_5 = arith.constant 0.000000e+00 : f32
    %6 = vector.broadcast %cst_5 : f32 to vector<512x128xf32>
    %7 = arith.maximumf %5, %6 : vector<512x128xf32>
    %c0_6 = arith.constant 0 : index
    %c0_7 = arith.constant 0 : index
    %8 = vector.load %arg4[%c0_6, %c0_7] : memref<128x64xf32, #tpu.memory_space<vmem>>, vector<128x64xf32>
    %cst_8 = arith.constant dense<0.000000e+00> : vector<512x64xf32>
    %9 = tpu.matmul %7, %8, %cst_8 {dimension_numbers = #tpu.dot_dimension_numbers<[1], [0], [0], [1], [0, 0, 1, 1], [], []>} : vector<512x128xf32>, vector<128x64xf32>, vector<512x64xf32> -> vector<512x64xf32>
    %c0_9 = arith.constant 0 : index
    %c0_10 = arith.constant 0 : index
    %10 = vector.load %arg5[%c0_9, %c0_10] : memref<1x64xf32, #tpu.memory_space<vmem>>, vector<1x64xf32>
    %11 = vector.broadcast %10 : vector<1x64xf32> to vector<512x64xf32>
    %12 = arith.addf %9, %11 : vector<512x64xf32>
    %cst_11 = arith.constant 0.000000e+00 : f32
    %13 = vector.broadcast %cst_11 : f32 to vector<512x64xf32>
    %14 = arith.maximumf %12, %13 : vector<512x64xf32>
    %c0_12 = arith.constant 0 : index
    %c0_13 = arith.constant 0 : index
    %15 = vector.load %arg6[%c0_12, %c0_13] : memref<8x64xf32, #tpu.memory_space<vmem>>, vector<8x64xf32>
    %cst_14 = arith.constant dense<0.000000e+00> : vector<8x512xf32>
    %16 = tpu.matmul %15, %14, %cst_14 {dimension_numbers = #tpu.dot_dimension_numbers<[1], [1], [0], [0], [0, 0, 1, 0], [], []>} : vector<8x64xf32>, vector<512x64xf32>, vector<8x512xf32> -> vector<8x512xf32>
    %c0_15 = arith.constant 0 : index
    %c0_16 = arith.constant 0 : index
    %17 = vector.load %arg7[%c0_15, %c0_16] : memref<8x1xf32, #tpu.memory_space<vmem>>, vector<8x1xf32>
    %18 = vector.broadcast %17 : vector<8x1xf32> to vector<8x512xf32>
    %19 = arith.addf %16, %18 : vector<8x512xf32>
    %c0_17 = arith.constant 0 : index
    %c0_18 = arith.constant 0 : index
    %20 = vector.load %arg8[%c0_17, %c0_18] : memref<8x512xf32, #tpu.memory_space<vmem>>, vector<8x512xf32>
    tpu.vector_store %arg8[%c0_17, %c0_18], %19 {strides = array<i32>} : memref<8x512xf32, #tpu.memory_space<vmem>>, vector<8x512xf32>,
    return
  }
  func.func @transform_0(%arg0: i32) -> (i32, i32) {
    %c0_i32 = arith.constant 0 : i32
    %c0_i32_0 = arith.constant 0 : i32
    return %arg0, %c0_i32 : i32, i32
  }
  func.func @transform_1(%arg0: i32) -> (i32, i32) {
    %c0_i32 = arith.constant 0 : i32
    %c0_i32_0 = arith.constant 0 : i32
    %c0_i32_1 = arith.constant 0 : i32
    return %c0_i32, %c0_i32_0 : i32, i32
  }
  func.func @transform_2(%arg0: i32) -> (i32, i32) {
    %c0_i32 = arith.constant 0 : i32
    %c0_i32_0 = arith.constant 0 : i32
    %c0_i32_1 = arith.constant 0 : i32
    return %c0_i32, %c0_i32_0 : i32, i32
  }
  func.func @transform_3(%arg0: i32) -> (i32, i32) {
    %c0_i32 = arith.constant 0 : i32
    %c0_i32_0 = arith.constant 0 : i32
    %c0_i32_1 = arith.constant 0 : i32
    return %c0_i32, %c0_i32_0 : i32, i32
  }
  func.func @transform_4(%arg0: i32) -> (i32, i32) {
    %c0_i32 = arith.constant 0 : i32
    %c0_i32_0 = arith.constant 0 : i32
    %c0_i32_1 = arith.constant 0 : i32
    return %c0_i32, %c0_i32_0 : i32, i32
  }
  func.func @transform_5(%arg0: i32) -> (i32, i32) {
    %c0_i32 = arith.constant 0 : i32
    %c0_i32_0 = arith.constant 0 : i32
    %c0_i32_1 = arith.constant 0 : i32
    return %c0_i32, %c0_i32_0 : i32, i32
  }
  func.func @transform_6(%arg0: i32) -> (i32, i32) {
    %c0_i32 = arith.constant 0 : i32
    %c0_i32_0 = arith.constant 0 : i32
    %c0_i32_1 = arith.constant 0 : i32
    return %c0_i32, %c0_i32_0 : i32, i32
  }
  func.func @transform_7(%arg0: i32) -> (i32, i32) {
    %c0_i32 = arith.constant 0 : i32
    %c0_i32_0 = arith.constant 0 : i32
    return %c0_i32, %arg0 : i32, i32
  }
}

</mosaic_0001>

<llo_original>
// kernel: siamese_simple_forward.1
$region0: #{siamese_simple_forward.1}
  #allocation0 [shape = 'u32[]', space=smem, size = 0x4, offset = 0x4, fixed_abs, tag = 'smem constant byte address 0x4 - core index']
  #allocation1 [shape = 'u32[144,128]{1,0:T(1,128)}', space=vmem, size = 0x12000, scoped, tag = 'internal scratch']
  %s0 = inlined_call_operand.vmem [shape: bf16[512,21], index: 0, kind: input, shape index: {}]
  %s1 = inlined_call_operand.vmem [shape: bf16[21,128], index: 1, kind: input, shape index: {}]
  %s2 = inlined_call_operand.vmem [shape: f32[1,128], index: 2, kind: input, shape index: {}]
  %s3 = inlined_call_operand.vmem [shape: f32[128,64], index: 3, kind: input, shape index: {}]
  %s4 = inlined_call_operand.vmem [shape: f32[1,64], index: 4, kind: input, shape index: {}]
  %s5 = inlined_call_operand.vmem [shape: f32[8,64], index: 5, kind: input, shape index: {}]
  %s6 = inlined_call_operand.vmem [shape: f32[8,1], index: 6, kind: input, shape index: {}]
  %s7 = inlined_call_operand.vmem [shape: f32[8,512], index: 7, kind: output, shape index: {}]
  %s8 = sld [smem:[#allocation0]]
  $region38: #{siamese_simple_forward.1} parent=0
    _
  %s10 = ssub.s32 1, %s8
  %s11 = scalar_select 0, %s10, %s8
  // Predicated region
  $region2: #{siamese_simple_forward.1} parent=0 // pred_check
    _
  $region3: #{siamese_simple_forward.1} parent=0 // pred_check_branch
    %13 = sbr.rel (0) target = $region5
  $region4: #{siamese_simple_forward.1} parent=0 // pred_region
    _
  $region5: #{siamese_simple_forward.1} parent=0 // pred_fallthru
    _
  // Predicated region
  $region6: #{siamese_simple_forward.1} parent=0 // pred_check
    _
  $region7: #{siamese_simple_forward.1} parent=0 // pred_check_branch
    %15 = sbr.rel (0) target = $region9
  $region8: #{siamese_simple_forward.1} parent=0 // pred_region
    _
  $region9: #{siamese_simple_forward.1} parent=0 // pred_fallthru
    _
  // Predicated region
  $region10: #{siamese_simple_forward.1} parent=0 // pred_check
    _
  $region11: #{siamese_simple_forward.1} parent=0 // pred_check_branch
    %17 = sbr.rel (0) target = $region13
  $region12: #{siamese_simple_forward.1} parent=0 // pred_region
    _
  $region13: #{siamese_simple_forward.1} parent=0 // pred_fallthru
    _
  // Predicated region
  $region14: #{siamese_simple_forward.1} parent=0 // pred_check
    _
  $region15: #{siamese_simple_forward.1} parent=0 // pred_check_branch
    %19 = sbr.rel (0) target = $region17
  $region16: #{siamese_simple_forward.1} parent=0 // pred_region
    _
  $region17: #{siamese_simple_forward.1} parent=0 // pred_fallthru
    _
  // Predicated region
  $region18: #{siamese_simple_forward.1} parent=0 // pred_check
    _
  $region19: #{siamese_simple_forward.1} parent=0 // pred_check_branch
    %21 = sbr.rel (0) target = $region21
  $region20: #{siamese_simple_forward.1} parent=0 // pred_region
    _
  $region21: #{siamese_simple_forward.1} parent=0 // pred_fallthru
    _
  // Predicated region
  $region22: #{siamese_simple_forward.1} parent=0 // pred_check
    _
  $region23: #{siamese_simple_forward.1} parent=0 // pred_check_branch
    %23 = sbr.rel (0) target = $region25
  $region24: #{siamese_simple_forward.1} parent=0 // pred_region
    _
  $region25: #{siamese_simple_forward.1} parent=0 // pred_fallthru
    _
  // Predicated region
  $region26: #{siamese_simple_forward.1} parent=0 // pred_check
    _
  $region27: #{siamese_simple_forward.1} parent=0 // pred_check_branch
    %25 = sbr.rel (0) target = $region29
  $region28: #{siamese_simple_forward.1} parent=0 // pred_region
    _
  $region29: #{siamese_simple_forward.1} parent=0 // pred_fallthru
    _
  %v27 = vld [vmem:[%s0] sm:$0xf]
  %v28 = vld [vmem:[%s0 + $0x4] sm:$0xf]
  %v29 = vld [vmem:[%s0 + $0x8] sm:$0xf]
  %v30 = vld [vmem:[%s0 + $0xc] sm:$0xf]
  %v31 = vld [vmem:[%s0 + $0x10] sm:$0xf]
  %v32 = vld [vmem:[%s0 + $0x14] sm:$0xf]
  %v33 = vld [vmem:[%s0 + $0x18] sm:$0xf]
  %v34 = vld [vmem:[%s0 + $0x1c] sm:$0xf]
  %v35 = vld [vmem:[%s0 + $0x20] sm:$0xf]
  %v36 = vld [vmem:[%s0 + $0x24] sm:$0xf]
  %v37 = vld [vmem:[%s0 + $0x28] sm:$0xf]
  %v38 = vld [vmem:[%s0 + $0x2c] sm:$0xf]
  %v39 = vld [vmem:[%s0 + $0x30] sm:$0xf]
  %v40 = vld [vmem:[%s0 + $0x34] sm:$0xf]
  %v41 = vld [vmem:[%s0 + $0x38] sm:$0xf]
  %v42 = vld [vmem:[%s0 + $0x3c] sm:$0xf]
  %v43 = vld [vmem:[%s0 + $0x40] sm:$0xf]
  %v44 = vld [vmem:[%s0 + $0x44] sm:$0xf]
  %v45 = vld [vmem:[%s0 + $0x48] sm:$0xf]
  %v46 = vld [vmem:[%s0 + $0x4c] sm:$0xf]
  %v47 = vld [vmem:[%s0 + $0x50] sm:$0xf]
  %v48 = vld [vmem:[%s0 + $0x54] sm:$0xf]
  %v49 = vld [vmem:[%s0 + $0x58] sm:$0xf]
  %v50 = vld [vmem:[%s0 + $0x5c] sm:$0xf]
  %v51 = vld [vmem:[%s0 + $0x60] sm:$0xf]
  %v52 = vld [vmem:[%s0 + $0x64] sm:$0xf]
  %v53 = vld [vmem:[%s0 + $0x68] sm:$0xf]
  %v54 = vld [vmem:[%s0 + $0x6c] sm:$0xf]
  %v55 = vld [vmem:[%s0 + $0x70] sm:$0xf]
  %v56 = vld [vmem:[%s0 + $0x74] sm:$0xf]
  %v57 = vld [vmem:[%s0 + $0x78] sm:$0xf]
  %v58 = vld [vmem:[%s0 + $0x7c] sm:$0xf]
  %v59 = vld [vmem:[%s0 + $0x80] sm:$0xf]
  %v60 = vld [vmem:[%s0 + $0x84] sm:$0xf]
  %v61 = vld [vmem:[%s0 + $0x88] sm:$0xf]
  %v62 = vld [vmem:[%s0 + $0x8c] sm:$0xf]
  %v63 = vld [vmem:[%s0 + $0x90] sm:$0xf]
  %v64 = vld [vmem:[%s0 + $0x94] sm:$0xf]
  %v65 = vld [vmem:[%s0 + $0x98] sm:$0xf]
  %v66 = vld [vmem:[%s0 + $0x9c] sm:$0xf]
  %v67 = vld [vmem:[%s0 + $0xa0] sm:$0xf]
  %v68 = vld [vmem:[%s0 + $0xa4] sm:$0xf]
  %v69 = vld [vmem:[%s0 + $0xa8] sm:$0xf]
  %v70 = vld [vmem:[%s0 + $0xac] sm:$0xf]
  %v71 = vld [vmem:[%s0 + $0xb0] sm:$0xf]
  %v72 = vld [vmem:[%s0 + $0xb4] sm:$0xf]
  %v73 = vld [vmem:[%s0 + $0xb8] sm:$0xf]
  %v74 = vld [vmem:[%s0 + $0xbc] sm:$0xf]
  %v75 = vld [vmem:[%s0 + $0xc0] sm:$0xf]
  %v76 = vld [vmem:[%s0 + $0xc4] sm:$0xf]
  %v77 = vld [vmem:[%s0 + $0xc8] sm:$0xf]
  %v78 = vld [vmem:[%s0 + $0xcc] sm:$0xf]
  %v79 = vld [vmem:[%s0 + $0xd0] sm:$0xf]
  %v80 = vld [vmem:[%s0 + $0xd4] sm:$0xf]
  %v81 = vld [vmem:[%s0 + $0xd8] sm:$0xf]
  %v82 = vld [vmem:[%s0 + $0xdc] sm:$0xf]
  %v83 = vld [vmem:[%s0 + $0xe0] sm:$0xf]
  %v84 = vld [vmem:[%s0 + $0xe4] sm:$0xf]
  %v85 = vld [vmem:[%s0 + $0xe8] sm:$0xf]
  %v86 = vld [vmem:[%s0 + $0xec] sm:$0xf]
  %v87 = vld [vmem:[%s0 + $0xf0] sm:$0xf]
  %v88 = vld [vmem:[%s0 + $0xf4] sm:$0xf]
  %v89 = vld [vmem:[%s0 + $0xf8] sm:$0xf]
  %v90 = vld [vmem:[%s0 + $0xfc] sm:$0xf]
  %v91 = vld [vmem:[%s1] sm:$0xf]
  %v92 = vld [vmem:[%s1 + $0x4] sm:$0xf]
  %v93 = vld [vmem:[%s1 + $0x8] sm:$0x7]
  %v94 = vld [vmem:[%s2] sm:$0x1]
  %v96 = vlaneseq
  %v97 = vshrl.u32 %v96, 7
  %v98 = vsub.s32 0, %v97
  %v99 = vrot.slane %v94, %v98
  %v165 = vunpack.c.l.b16 %v27
  %v166 = vunpack.c.l.b16 %v28
  %v167 = vunpack.c.l.b16 %v29
  %v168 = vunpack.c.l.b16 %v30
  %v169 = vunpack.c.l.b16 %v31
  %v170 = vunpack.c.l.b16 %v32
  %v171 = vunpack.c.l.b16 %v33
  %v172 = vunpack.c.l.b16 %v34
  %v173 = vunpack.c.l.b16 %v35
  %v174 = vunpack.c.l.b16 %v36
  %v175 = vunpack.c.l.b16 %v37
  %v176 = vunpack.c.l.b16 %v38
  %v177 = vunpack.c.l.b16 %v39
  %v178 = vunpack.c.l.b16 %v40
  %v179 = vunpack.c.l.b16 %v41
  %v180 = vunpack.c.l.b16 %v42
  %v181 = vunpack.c.l.b16 %v43
  %v182 = vunpack.c.l.b16 %v44
  %v183 = vunpack.c.l.b16 %v45
  %v184 = vunpack.c.l.b16 %v46
  %v185 = vunpack.c.l.b16 %v47
  %v186 = vunpack.c.l.b16 %v48
  %v187 = vunpack.c.l.b16 %v49
  %v188 = vunpack.c.l.b16 %v50
  %v189 = vunpack.c.l.b16 %v51
  %v190 = vunpack.c.l.b16 %v52
  %v191 = vunpack.c.l.b16 %v53
  %v192 = vunpack.c.l.b16 %v54
  %v193 = vunpack.c.l.b16 %v55
  %v194 = vunpack.c.l.b16 %v56
  %v195 = vunpack.c.l.b16 %v57
  %v196 = vunpack.c.l.b16 %v58
  %v197 = vunpack.c.l.b16 %v59
  %v198 = vunpack.c.l.b16 %v60
  %v199 = vunpack.c.l.b16 %v61
  %v200 = vunpack.c.l.b16 %v62
  %v201 = vunpack.c.l.b16 %v63
  %v202 = vunpack.c.l.b16 %v64
  %v203 = vunpack.c.l.b16 %v65
  %v204 = vunpack.c.l.b16 %v66
  %v205 = vunpack.c.l.b16 %v67
  %v206 = vunpack.c.l.b16 %v68
  %v207 = vunpack.c.l.b16 %v69
  %v208 = vunpack.c.l.b16 %v70
  %v209 = vunpack.c.l.b16 %v71
  %v210 = vunpack.c.l.b16 %v72
  %v211 = vunpack.c.l.b16 %v73
  %v212 = vunpack.c.l.b16 %v74
  %v213 = vunpack.c.l.b16 %v75
  %v214 = vunpack.c.l.b16 %v76
  %v215 = vunpack.c.l.b16 %v77
  %v216 = vunpack.c.l.b16 %v78
  %v217 = vunpack.c.l.b16 %v79
  %v218 = vunpack.c.l.b16 %v80
  %v219 = vunpack.c.l.b16 %v81
  %v220 = vunpack.c.l.b16 %v82
  %v221 = vunpack.c.l.b16 %v83
  %v222 = vunpack.c.l.b16 %v84
  %v223 = vunpack.c.l.b16 %v85
  %v224 = vunpack.c.l.b16 %v86
  %v225 = vunpack.c.l.b16 %v87
  %v226 = vunpack.c.l.b16 %v88
  %v227 = vunpack.c.l.b16 %v89
  %v228 = vunpack.c.l.b16 %v90
  %v229 = vpack.c.b16 %v166, %v165
  %v230 = vpack.c.b16 %v168, %v167
  %v231 = vpack.c.b16 %v170, %v169
  %v232 = vpack.c.b16 %v172, %v171
  %v233 = vpack.c.b16 %v174, %v173
  %v234 = vpack.c.b16 %v176, %v175
  %v235 = vpack.c.b16 %v178, %v177
  %v236 = vpack.c.b16 %v180, %v179
  %v237 = vpack.c.b16 %v182, %v181
  %v238 = vpack.c.b16 %v184, %v183
  %v239 = vpack.c.b16 %v186, %v185
  %v240 = vpack.c.b16 %v188, %v187
  %v241 = vpack.c.b16 %v190, %v189
  %v242 = vpack.c.b16 %v192, %v191
  %v243 = vpack.c.b16 %v194, %v193
  %v244 = vpack.c.b16 %v196, %v195
  %v245 = vpack.c.b16 %v198, %v197
  %v246 = vpack.c.b16 %v200, %v199
  %v247 = vpack.c.b16 %v202, %v201
  %v248 = vpack.c.b16 %v204, %v203
  %v249 = vpack.c.b16 %v206, %v205
  %v250 = vpack.c.b16 %v208, %v207
  %v251 = vpack.c.b16 %v210, %v209
  %v252 = vpack.c.b16 %v212, %v211
  %v253 = vpack.c.b16 %v214, %v213
  %v254 = vpack.c.b16 %v216, %v215
  %v255 = vpack.c.b16 %v218, %v217
  %v256 = vpack.c.b16 %v220, %v219
  %v257 = vpack.c.b16 %v222, %v221
  %v258 = vpack.c.b16 %v224, %v223
  %v259 = vpack.c.b16 %v226, %v225
  %v260 = vpack.c.b16 %v228, %v227
  %v264 = vunpack.c.l.b16 %v91
  %v265 = vunpack.c.l.b16 %v92
  %v266 = vunpack.c.l.b16 %v93
  %v267 = vpack.c.b16 %v265, %v264
  %v268 = vpack.c.b16 %v266, %v266
  %vm270 = vcmask 171008
  %v272 = vsel %vm270, %v229, 0
  %v275 = vsel %vm270, %v230, 0
  %v278 = vsel %vm270, %v231, 0
  %v281 = vsel %vm270, %v232, 0
  %v284 = vsel %vm270, %v233, 0
  %v287 = vsel %vm270, %v234, 0
  %v290 = vsel %vm270, %v235, 0
  %v293 = vsel %vm270, %v236, 0
  %v296 = vsel %vm270, %v237, 0
  %v299 = vsel %vm270, %v238, 0
  %v302 = vsel %vm270, %v239, 0
  %v305 = vsel %vm270, %v240, 0
  %v308 = vsel %vm270, %v241, 0
  %v311 = vsel %vm270, %v242, 0
  %v314 = vsel %vm270, %v243, 0
  %v317 = vsel %vm270, %v244, 0
  %v320 = vsel %vm270, %v245, 0
  %v323 = vsel %vm270, %v246, 0
  %v326 = vsel %vm270, %v247, 0
  %v329 = vsel %vm270, %v248, 0
  %v332 = vsel %vm270, %v249, 0
  %v335 = vsel %vm270, %v250, 0
  %v338 = vsel %vm270, %v251, 0
  %v341 = vsel %vm270, %v252, 0
  %v344 = vsel %vm270, %v253, 0
  %v347 = vsel %vm270, %v254, 0
  %v350 = vsel %vm270, %v255, 0
  %v353 = vsel %vm270, %v256, 0
  %v356 = vsel %vm270, %v257, 0
  %v359 = vsel %vm270, %v258, 0
  %v362 = vsel %vm270, %v259, 0
  %v365 = vsel %vm270, %v260, 0
  %vm367 = vcmask 1041408
  %vm368 = vcmask 1042432
  %v369 = vsel %vm367, 4294967295, 65535
  %v370 = vsel %vm368, %v369, 0
  %v372 = vand.u32 %v268, %v370
  %374 = vmatprep.subr.bf16.mxu0 0
  %375 = vmatpush1.bf16.msra.mxu0 %v267
  %376 = vmatprep.subr.bf16.mxu0 0
  %377 = vmatpush1.bf16.msra.mxu0 %v372
  %378 = vmatprep.subr.bf16.mxu0 0
  %379 = vmatpush1.bf16.msra.mxu0 0
  %380 = vmatprep.subr.bf16.mxu0 0
  %381 = vmatpush1.bf16.msra.mxu0 0
  %382 = vmatprep.subr.bf16.mxu0 0
  %383 = vmatpush1.bf16.msra.mxu0 0
  %384 = vmatprep.subr.bf16.mxu0 0
  %385 = vmatpush1.bf16.msra.mxu0 0
  %386 = vmatprep.subr.bf16.mxu0 0
  %387 = vmatpush1.bf16.msra.mxu0 0
  %388 = vmatprep.subr.bf16.mxu0 0
  %389 = vmatpush1.bf16.msra.mxu0 0
  %390 = vmatprep.subr.bf16.mxu0 0
  %391 = vmatpush1.bf16.msra.mxu0 0
  %392 = vmatprep.subr.bf16.mxu0 0
  %393 = vmatpush1.bf16.msra.mxu0 0
  %394 = vmatprep.subr.bf16.mxu0 0
  %395 = vmatpush1.bf16.msra.mxu0 0
  %396 = vmatprep.subr.bf16.mxu0 0
  %397 = vmatpush1.bf16.msra.mxu0 0
  %398 = vmatprep.subr.bf16.mxu0 0
  %399 = vmatpush1.bf16.msra.mxu0 0
  %400 = vmatprep.subr.bf16.mxu0 0
  %401 = vmatpush1.bf16.msra.mxu0 0
  %402 = vmatprep.subr.bf16.mxu0 0
  %403 = vmatpush1.bf16.msra.mxu0 0
  %404 = vmatprep.subr.bf16.mxu0 0
  %405 = vmatpush1.bf16.msra.mxu0 0
  %406 = vmatprep.mubr.bf16.mxu0 0
  %407 = vmatmul.mubr.bf16.gmra.mrb[0].mxu0 %v272
  %v408 = vpop.f32.mrb[0].mxu0
  %v409 = vadd.f32 %v99, %v408
  %v410 = vpop.f32.mrb[0].mxu0
  %v411 = vpop.f32.mrb[0].mxu0
  %v412 = vadd.f32 %v99, %v411
  %v413 = vpop.f32.mrb[0].mxu0
  %414 = vmatprep.mubr.bf16.mxu0 0
  %415 = vmatmul.mubr.bf16.gmra.mrb[0].mxu0 %v275
  %v416 = vpop.f32.mrb[0].mxu0
  %v417 = vadd.f32 %v99, %v416
  %v418 = vpop.f32.mrb[0].mxu0
  %v419 = vpop.f32.mrb[0].mxu0
  %v420 = vadd.f32 %v99, %v419
  %v421 = vpop.f32.mrb[0].mxu0
  %422 = vmatprep.mubr.bf16.mxu0 0
  %423 = vmatmul.mubr.bf16.gmra.mrb[0].mxu0 %v278
  %v424 = vpop.f32.mrb[0].mxu0
  %v425 = vadd.f32 %v99, %v424
  %v426 = vpop.f32.mrb[0].mxu0
  %v427 = vpop.f32.mrb[0].mxu0
  %v428 = vadd.f32 %v99, %v427
  %v429 = vpop.f32.mrb[0].mxu0
  %430 = vmatprep.mubr.bf16.mxu0 0
  %431 = vmatmul.mubr.bf16.gmra.mrb[0].mxu0 %v281
  %v432 = vpop.f32.mrb[0].mxu0
  %v433 = vadd.f32 %v99, %v432
  %v434 = vpop.f32.mrb[0].mxu0
  %v435 = vpop.f32.mrb[0].mxu0
  %v436 = vadd.f32 %v99, %v435
  %v437 = vpop.f32.mrb[0].mxu0
  %438 = vmatprep.mubr.bf16.mxu0 0
  %439 = vmatmul.mubr.bf16.gmra.mrb[0].mxu0 %v284
  %v440 = vpop.f32.mrb[0].mxu0
  %v441 = vadd.f32 %v99, %v440
  %v442 = vpop.f32.mrb[0].mxu0
  %v443 = vpop.f32.mrb[0].mxu0
  %v444 = vadd.f32 %v99, %v443
  %v445 = vpop.f32.mrb[0].mxu0
  %446 = vmatprep.mubr.bf16.mxu0 0
  %447 = vmatmul.mubr.bf16.gmra.mrb[0].mxu0 %v287
  %v448 = vpop.f32.mrb[0].mxu0
  %v449 = vadd.f32 %v99, %v448
  %v450 = vpop.f32.mrb[0].mxu0
  %v451 = vpop.f32.mrb[0].mxu0
  %v452 = vadd.f32 %v99, %v451
  %v453 = vpop.f32.mrb[0].mxu0
  %454 = vmatprep.mubr.bf16.mxu0 0
  %455 = vmatmul.mubr.bf16.gmra.mrb[0].mxu0 %v290
  %v456 = vpop.f32.mrb[0].mxu0
  %v457 = vadd.f32 %v99, %v456
  %v458 = vpop.f32.mrb[0].mxu0
  %v459 = vpop.f32.mrb[0].mxu0
  %v460 = vadd.f32 %v99, %v459
  %v461 = vpop.f32.mrb[0].mxu0
  %462 = vmatprep.mubr.bf16.mxu0 0
  %463 = vmatmul.mubr.bf16.gmra.mrb[0].mxu0 %v293
  %v464 = vpop.f32.mrb[0].mxu0
  %v465 = vadd.f32 %v99, %v464
  %v466 = vpop.f32.mrb[0].mxu0
  %v467 = vpop.f32.mrb[0].mxu0
  %v468 = vadd.f32 %v99, %v467
  %v469 = vpop.f32.mrb[0].mxu0
  %470 = vmatprep.mubr.bf16.mxu0 0
  %471 = vmatmul.mubr.bf16.gmra.mrb[0].mxu0 %v296
  %v472 = vpop.f32.mrb[0].mxu0
  %v473 = vadd.f32 %v99, %v472
  %v474 = vpop.f32.mrb[0].mxu0
  %v475 = vpop.f32.mrb[0].mxu0
  %v476 = vadd.f32 %v99, %v475
  %v477 = vpop.f32.mrb[0].mxu0
  %478 = vmatprep.mubr.bf16.mxu0 0
  %479 = vmatmul.mubr.bf16.gmra.mrb[0].mxu0 %v299
  %v480 = vpop.f32.mrb[0].mxu0
  %v481 = vadd.f32 %v99, %v480
  %v482 = vpop.f32.mrb[0].mxu0
  %v483 = vpop.f32.mrb[0].mxu0
  %v484 = vadd.f32 %v99, %v483
  %v485 = vpop.f32.mrb[0].mxu0
  %486 = vmatprep.mubr.bf16.mxu0 0
  %487 = vmatmul.mubr.bf16.gmra.mrb[0].mxu0 %v302
  %v488 = vpop.f32.mrb[0].mxu0
  %v489 = vadd.f32 %v99, %v488
  %v490 = vpop.f32.mrb[0].mxu0
  %v491 = vpop.f32.mrb[0].mxu0
  %v492 = vadd.f32 %v99, %v491
  %v493 = vpop.f32.mrb[0].mxu0
  %494 = vmatprep.mubr.bf16.mxu0 0
  %495 = vmatmul.mubr.bf16.gmra.mrb[0].mxu0 %v305
  %v496 = vpop.f32.mrb[0].mxu0
  %v497 = vadd.f32 %v99, %v496
  %v498 = vpop.f32.mrb[0].mxu0
  %v499 = vpop.f32.mrb[0].mxu0
  %v500 = vadd.f32 %v99, %v499
  %v501 = vpop.f32.mrb[0].mxu0
  %502 = vmatprep.mubr.bf16.mxu0 0
  %503 = vmatmul.mubr.bf16.gmra.mrb[0].mxu0 %v308
  %v504 = vpop.f32.mrb[0].mxu0
  %v505 = vadd.f32 %v99, %v504
  %v506 = vpop.f32.mrb[0].mxu0
  %v507 = vpop.f32.mrb[0].mxu0
  %v508 = vadd.f32 %v99, %v507
  %v509 = vpop.f32.mrb[0].mxu0
  %510 = vmatprep.mubr.bf16.mxu0 0
  %511 = vmatmul.mubr.bf16.gmra.mrb[0].mxu0 %v311
  %v512 = vpop.f32.mrb[0].mxu0
  %v513 = vadd.f32 %v99, %v512
  %v514 = vpop.f32.mrb[0].mxu0
  %v515 = vpop.f32.mrb[0].mxu0
  %v516 = vadd.f32 %v99, %v515
  %v517 = vpop.f32.mrb[0].mxu0
  %518 = vmatprep.mubr.bf16.mxu0 0
  %519 = vmatmul.mubr.bf16.gmra.mrb[0].mxu0 %v314
  %v520 = vpop.f32.mrb[0].mxu0
  %v521 = vadd.f32 %v99, %v520
  %v522 = vpop.f32.mrb[0].mxu0
  %v523 = vpop.f32.mrb[0].mxu0
  %v524 = vadd.f32 %v99, %v523
  %v525 = vpop.f32.mrb[0].mxu0
  %526 = vmatprep.mubr.bf16.mxu0 0
  %527 = vmatmul.mubr.bf16.gmra.mrb[0].mxu0 %v317
  %v528 = vpop.f32.mrb[0].mxu0
  %v529 = vadd.f32 %v99, %v528
  %v530 = vpop.f32.mrb[0].mxu0
  %v531 = vpop.f32.mrb[0].mxu0
  %v532 = vadd.f32 %v99, %v531
  %v533 = vpop.f32.mrb[0].mxu0
  %534 = vmatprep.mubr.bf16.mxu0 0
  %535 = vmatmul.mubr.bf16.gmra.mrb[0].mxu0 %v320
  %v536 = vpop.f32.mrb[0].mxu0
  %v537 = vadd.f32 %v99, %v536
  %v538 = vpop.f32.mrb[0].mxu0
  %v539 = vpop.f32.mrb[0].mxu0
  %v540 = vadd.f32 %v99, %v539
  %v541 = vpop.f32.mrb[0].mxu0
  %542 = vmatprep.mubr.bf16.mxu0 0
  %543 = vmatmul.mubr.bf16.gmra.mrb[0].mxu0 %v323
  %v544 = vpop.f32.mrb[0].mxu0
  %v545 = vadd.f32 %v99, %v544
  %v546 = vpop.f32.mrb[0].mxu0
  %v547 = vpop.f32.mrb[0].mxu0
  %v548 = vadd.f32 %v99, %v547
  %v549 = vpop.f32.mrb[0].mxu0
  %550 = vmatprep.mubr.bf16.mxu0 0
  %551 = vmatmul.mubr.bf16.gmra.mrb[0].mxu0 %v326
  %v552 = vpop.f32.mrb[0].mxu0
  %v553 = vadd.f32 %v99, %v552
  %v554 = vpop.f32.mrb[0].mxu0
  %v555 = vpop.f32.mrb[0].mxu0
  %v556 = vadd.f32 %v99, %v555
  %v557 = vpop.f32.mrb[0].mxu0
  %558 = vmatprep.mubr.bf16.mxu0 0
  %559 = vmatmul.mubr.bf16.gmra.mrb[0].mxu0 %v329
  %v560 = vpop.f32.mrb[0].mxu0
  %v561 = vadd.f32 %v99, %v560
  %v562 = vpop.f32.mrb[0].mxu0
  %v563 = vpop.f32.mrb[0].mxu0
  %v564 = vadd.f32 %v99, %v563
  %v565 = vpop.f32.mrb[0].mxu0
  %566 = vmatprep.mubr.bf16.mxu0 0
  %567 = vmatmul.mubr.bf16.gmra.mrb[0].mxu0 %v332
  %v568 = vpop.f32.mrb[0].mxu0
  %v569 = vadd.f32 %v99, %v568
  %v570 = vpop.f32.mrb[0].mxu0
  %v571 = vpop.f32.mrb[0].mxu0
  %v572 = vadd.f32 %v99, %v571
  %v573 = vpop.f32.mrb[0].mxu0
  %574 = vmatprep.mubr.bf16.mxu0 0
  %575 = vmatmul.mubr.bf16.gmra.mrb[0].mxu0 %v335
  %v576 = vpop.f32.mrb[0].mxu0
  %v577 = vadd.f32 %v99, %v576
  %v578 = vpop.f32.mrb[0].mxu0
  %v579 = vpop.f32.mrb[0].mxu0
  %v580 = vadd.f32 %v99, %v579
  %v581 = vpop.f32.mrb[0].mxu0
  %582 = vmatprep.mubr.bf16.mxu0 0
  %583 = vmatmul.mubr.bf16.gmra.mrb[0].mxu0 %v338
  %v584 = vpop.f32.mrb[0].mxu0
  %v585 = vadd.f32 %v99, %v584
  %v586 = vpop.f32.mrb[0].mxu0
  %v587 = vpop.f32.mrb[0].mxu0
  %v588 = vadd.f32 %v99, %v587
  %v589 = vpop.f32.mrb[0].mxu0
  %590 = vmatprep.mubr.bf16.mxu0 0
  %591 = vmatmul.mubr.bf16.gmra.mrb[0].mxu0 %v341
  %v592 = vpop.f32.mrb[0].mxu0
  %v593 = vadd.f32 %v99, %v592
  %v594 = vpop.f32.mrb[0].mxu0
  %v595 = vpop.f32.mrb[0].mxu0
  %v596 = vadd.f32 %v99, %v595
  %v597 = vpop.f32.mrb[0].mxu0
  %598 = vmatprep.mubr.bf16.mxu0 0
  %599 = vmatmul.mubr.bf16.gmra.mrb[0].mxu0 %v344
  %v600 = vpop.f32.mrb[0].mxu0
  %v601 = vadd.f32 %v99, %v600
  %v602 = vpop.f32.mrb[0].mxu0
  %v603 = vpop.f32.mrb[0].mxu0
  %v604 = vadd.f32 %v99, %v603
  %v605 = vpop.f32.mrb[0].mxu0
  %606 = vmatprep.mubr.bf16.mxu0 0
  %607 = vmatmul.mubr.bf16.gmra.mrb[0].mxu0 %v347
  %v608 = vpop.f32.mrb[0].mxu0
  %v609 = vadd.f32 %v99, %v608
  %v610 = vpop.f32.mrb[0].mxu0
  %v611 = vpop.f32.mrb[0].mxu0
  %v612 = vadd.f32 %v99, %v611
  %v613 = vpop.f32.mrb[0].mxu0
  %614 = vmatprep.mubr.bf16.mxu0 0
  %615 = vmatmul.mubr.bf16.gmra.mrb[0].mxu0 %v350
  %v616 = vpop.f32.mrb[0].mxu0
  %v617 = vadd.f32 %v99, %v616
  %v618 = vpop.f32.mrb[0].mxu0
  %v619 = vpop.f32.mrb[0].mxu0
  %v620 = vadd.f32 %v99, %v619
  %v621 = vpop.f32.mrb[0].mxu0
  %622 = vmatprep.mubr.bf16.mxu0 0
  %623 = vmatmul.mubr.bf16.gmra.mrb[0].mxu0 %v353
  %v624 = vpop.f32.mrb[0].mxu0
  %v625 = vadd.f32 %v99, %v624
  %v626 = vpop.f32.mrb[0].mxu0
  %v627 = vpop.f32.mrb[0].mxu0
  %v628 = vadd.f32 %v99, %v627
  %v629 = vpop.f32.mrb[0].mxu0
  %630 = vmatprep.mubr.bf16.mxu0 0
  %631 = vmatmul.mubr.bf16.gmra.mrb[0].mxu0 %v356
  %v632 = vpop.f32.mrb[0].mxu0
  %v633 = vadd.f32 %v99, %v632
  %v634 = vpop.f32.mrb[0].mxu0
  %v635 = vpop.f32.mrb[0].mxu0
  %v636 = vadd.f32 %v99, %v635
  %v637 = vpop.f32.mrb[0].mxu0
  %638 = vmatprep.mubr.bf16.mxu0 0
  %639 = vmatmul.mubr.bf16.gmra.mrb[0].mxu0 %v359
  %v640 = vpop.f32.mrb[0].mxu0
  %v641 = vadd.f32 %v99, %v640
  %v642 = vpop.f32.mrb[0].mxu0
  %v643 = vpop.f32.mrb[0].mxu0
  %v644 = vadd.f32 %v99, %v643
  %v645 = vpop.f32.mrb[0].mxu0
  %646 = vmatprep.mubr.bf16.mxu0 0
  %647 = vmatmul.mubr.bf16.gmra.mrb[0].mxu0 %v362
  %v648 = vpop.f32.mrb[0].mxu0
  %v649 = vadd.f32 %v99, %v648
  %v650 = vpop.f32.mrb[0].mxu0
  %v651 = vpop.f32.mrb[0].mxu0
  %v652 = vadd.f32 %v99, %v651
  %v653 = vpop.f32.mrb[0].mxu0
  %654 = vmatprep.mubr.bf16.mxu0 0
  %655 = vmatmul.mubr.bf16.gmra.mrb[0].mxu0 %v365
  %v656 = vpop.f32.mrb[0].mxu0
  %v657 = vadd.f32 %v99, %v656
  %v658 = vpop.f32.mrb[0].mxu0
  %v659 = vpop.f32.mrb[0].mxu0
  %v660 = vadd.f32 %v99, %v659
  %v661 = vpop.f32.mrb[0].mxu0
  %662 = vdwg.mxu0
  %v663 = vmax.f32 %v409, 0.0
  %v664 = vmax.f32 %v412, 0.0
  %v665 = vmax.f32 %v417, 0.0
  %v666 = vmax.f32 %v420, 0.0
  %v667 = vmax.f32 %v425, 0.0
  %v668 = vmax.f32 %v428, 0.0
  %v669 = vmax.f32 %v433, 0.0
  %v670 = vmax.f32 %v436, 0.0
  %v671 = vmax.f32 %v441, 0.0
  %v672 = vmax.f32 %v444, 0.0
  %v673 = vmax.f32 %v449, 0.0
  %v674 = vmax.f32 %v452, 0.0
  %v675 = vmax.f32 %v457, 0.0
  %v676 = vmax.f32 %v460, 0.0
  %v677 = vmax.f32 %v465, 0.0
  %v678 = vmax.f32 %v468, 0.0
  %v679 = vmax.f32 %v473, 0.0
  %v680 = vmax.f32 %v476, 0.0
  %v681 = vmax.f32 %v481, 0.0
  %v682 = vmax.f32 %v484, 0.0
  %v683 = vmax.f32 %v489, 0.0
  %v684 = vmax.f32 %v492, 0.0
  %v685 = vmax.f32 %v497, 0.0
  %v686 = vmax.f32 %v500, 0.0
  %v687 = vmax.f32 %v505, 0.0
  %v688 = vmax.f32 %v508, 0.0
  %v689 = vmax.f32 %v513, 0.0
  %v690 = vmax.f32 %v516, 0.0
  %v691 = vmax.f32 %v521, 0.0
  %v692 = vmax.f32 %v524, 0.0
  %v693 = vmax.f32 %v529, 0.0
  %v694 = vmax.f32 %v532, 0.0
  %v695 = vmax.f32 %v537, 0.0
  %v696 = vmax.f32 %v540, 0.0
  %v697 = vmax.f32 %v545, 0.0
  %v698 = vmax.f32 %v548, 0.0
  %v699 = vmax.f32 %v553, 0.0
  %v700 = vmax.f32 %v556, 0.0
  %v701 = vmax.f32 %v561, 0.0
  %v702 = vmax.f32 %v564, 0.0
  %v703 = vmax.f32 %v569, 0.0
  %v704 = vmax.f32 %v572, 0.0
  %v705 = vmax.f32 %v577, 0.0
  %v706 = vmax.f32 %v580, 0.0
  %v707 = vmax.f32 %v585, 0.0
  %v708 = vmax.f32 %v588, 0.0
  %v709 = vmax.f32 %v593, 0.0
  %v710 = vmax.f32 %v596, 0.0
  %v711 = vmax.f32 %v601, 0.0
  %v712 = vmax.f32 %v604, 0.0
  %v713 = vmax.f32 %v609, 0.0
  %v714 = vmax.f32 %v612, 0.0
  %v715 = vmax.f32 %v617, 0.0
  %v716 = vmax.f32 %v620, 0.0
  %v717 = vmax.f32 %v625, 0.0
  %v718 = vmax.f32 %v628, 0.0
  %v719 = vmax.f32 %v633, 0.0
  %v720 = vmax.f32 %v636, 0.0
  %v721 = vmax.f32 %v641, 0.0
  %v722 = vmax.f32 %v644, 0.0
  %v723 = vmax.f32 %v649, 0.0
  %v724 = vmax.f32 %v652, 0.0
  %v725 = vmax.f32 %v657, 0.0
  %v726 = vmax.f32 %v660, 0.0
  %v727 = vld [vmem:[%s3] sm:$0xff]
  %v728 = vld [vmem:[%s3 + $0x8] sm:$0xff]
  %v729 = vld [vmem:[%s3 + $0x10] sm:$0xff]
  %v730 = vld [vmem:[%s3 + $0x18] sm:$0xff]
  %v731 = vld [vmem:[%s3 + $0x20] sm:$0xff]
  %v732 = vld [vmem:[%s3 + $0x28] sm:$0xff]
  %v733 = vld [vmem:[%s3 + $0x30] sm:$0xff]
  %v734 = vld [vmem:[%s3 + $0x38] sm:$0xff]
  %v735 = vld [vmem:[%s3 + $0x40] sm:$0xff]
  %v736 = vld [vmem:[%s3 + $0x48] sm:$0xff]
  %v737 = vld [vmem:[%s3 + $0x50] sm:$0xff]
  %v738 = vld [vmem:[%s3 + $0x58] sm:$0xff]
  %v739 = vld [vmem:[%s3 + $0x60] sm:$0xff]
  %v740 = vld [vmem:[%s3 + $0x68] sm:$0xff]
  %v741 = vld [vmem:[%s3 + $0x70] sm:$0xff]
  %v742 = vld [vmem:[%s3 + $0x78] sm:$0xff]
  %v743 = vld [vmem:[%s4] sm:$0x1]
  %v745 = vlaneseq
  %v746 = vshrl.u32 %v745, 7
  %v747 = vsub.s32 0, %v746
  %v748 = vrot.slane %v743, %v747
  %750 = vmatprep.subr.mxu0 0.0
  %751 = vmatpush1.msra.mxu0 %v727
  %752 = vmatprep.subr.mxu0 0.0
  %753 = vmatpush1.msra.mxu0 %v728
  %754 = vmatprep.subr.mxu0 0.0
  %755 = vmatpush1.msra.mxu0 %v729
  %756 = vmatprep.subr.mxu0 0.0
  %757 = vmatpush1.msra.mxu0 %v730
  %758 = vmatprep.subr.mxu0 0.0
  %759 = vmatpush1.msra.mxu0 %v731
  %760 = vmatprep.subr.mxu0 0.0
  %761 = vmatpush1.msra.mxu0 %v732
  %762 = vmatprep.subr.mxu0 0.0
  %763 = vmatpush1.msra.mxu0 %v733
  %764 = vmatprep.subr.mxu0 0.0
  %765 = vmatpush1.msra.mxu0 %v734
  %766 = vmatprep.subr.mxu0 0.0
  %767 = vmatpush1.msra.mxu0 %v735
  %768 = vmatprep.subr.mxu0 0.0
  %769 = vmatpush1.msra.mxu0 %v736
  %770 = vmatprep.subr.mxu0 0.0
  %771 = vmatpush1.msra.mxu0 %v737
  %772 = vmatprep.subr.mxu0 0.0
  %773 = vmatpush1.msra.mxu0 %v738
  %774 = vmatprep.subr.mxu0 0.0
  %775 = vmatpush1.msra.mxu0 %v739
  %776 = vmatprep.subr.mxu0 0.0
  %777 = vmatpush1.msra.mxu0 %v740
  %778 = vmatprep.subr.mxu0 0.0
  %779 = vmatpush1.msra.mxu0 %v741
  %780 = vmatprep.subr.mxu0 0.0
  %781 = vmatpush1.msra.mxu0 %v742
  %782 = vmatprep.subr.mxu0 0.0
  %783 = vmatpush1.msra.mxu0 0.0
  %784 = vmatprep.subr.mxu0 0.0
  %785 = vmatpush1.msra.mxu0 0.0
  %786 = vmatprep.subr.mxu0 0.0
  %787 = vmatpush1.msra.mxu0 0.0
  %788 = vmatprep.subr.mxu0 0.0
  %789 = vmatpush1.msra.mxu0 0.0
  %790 = vmatprep.subr.mxu0 0.0
  %791 = vmatpush1.msra.mxu0 0.0
  %792 = vmatprep.subr.mxu0 0.0
  %793 = vmatpush1.msra.mxu0 0.0
  %794 = vmatprep.subr.mxu0 0.0
  %795 = vmatpush1.msra.mxu0 0.0
  %796 = vmatprep.subr.mxu0 0.0
  %797 = vmatpush1.msra.mxu0 0.0
  %798 = vmatprep.subr.mxu0 0.0
  %799 = vmatpush1.msra.mxu0 0.0
  %800 = vmatprep.subr.mxu0 0.0
  %801 = vmatpush1.msra.mxu0 0.0
  %802 = vmatprep.subr.mxu0 0.0
  %803 = vmatpush1.msra.mxu0 0.0
  %804 = vmatprep.subr.mxu0 0.0
  %805 = vmatpush1.msra.mxu0 0.0
  %806 = vmatprep.subr.mxu0 0.0
  %807 = vmatpush1.msra.mxu0 0.0
  %808 = vmatprep.subr.mxu0 0.0
  %809 = vmatpush1.msra.mxu0 0.0
  %810 = vmatprep.subr.mxu0 0.0
  %811 = vmatpush1.msra.mxu0 0.0
  %812 = vmatprep.subr.mxu0 0.0
  %813 = vmatpush1.msra.mxu0 0.0
  %814 = vmatprep.mubr.f32.mxu0 0.0
  %815 = vmatmul.mubr.f32.gmra.mrb[0].mxu0 %v663
  %v816 = vpop.f32.mrb[0].mxu0
  %v817 = vadd.f32 %v748, %v816
  %v818 = vpop.f32.mrb[0].mxu0
  %819 = vmatprep.mubr.f32.mxu0 0.0
  %820 = vmatmul.mubr.f32.gmra.mrb[0].mxu0 %v664
  %v821 = vpop.f32.mrb[0].mxu0
  %v822 = vadd.f32 %v748, %v821
  %v823 = vpop.f32.mrb[0].mxu0
  %824 = vmatprep.mubr.f32.mxu0 0.0
  %825 = vmatmul.mubr.f32.gmra.mrb[0].mxu0 %v665
  %v826 = vpop.f32.mrb[0].mxu0
  %v827 = vadd.f32 %v748, %v826
  %v828 = vpop.f32.mrb[0].mxu0
  %829 = vmatprep.mubr.f32.mxu0 0.0
  %830 = vmatmul.mubr.f32.gmra.mrb[0].mxu0 %v666
  %v831 = vpop.f32.mrb[0].mxu0
  %v832 = vadd.f32 %v748, %v831
  %v833 = vpop.f32.mrb[0].mxu0
  %834 = vmatprep.mubr.f32.mxu0 0.0
  %835 = vmatmul.mubr.f32.gmra.mrb[0].mxu0 %v667
  %v836 = vpop.f32.mrb[0].mxu0
  %v837 = vadd.f32 %v748, %v836
  %v838 = vpop.f32.mrb[0].mxu0
  %839 = vmatprep.mubr.f32.mxu0 0.0
  %840 = vmatmul.mubr.f32.gmra.mrb[0].mxu0 %v668
  %v841 = vpop.f32.mrb[0].mxu0
  %v842 = vadd.f32 %v748, %v841
  %v843 = vpop.f32.mrb[0].mxu0
  %844 = vmatprep.mubr.f32.mxu0 0.0
  %845 = vmatmul.mubr.f32.gmra.mrb[0].mxu0 %v669
  %v846 = vpop.f32.mrb[0].mxu0
  %v847 = vadd.f32 %v748, %v846
  %v848 = vpop.f32.mrb[0].mxu0
  %849 = vmatprep.mubr.f32.mxu0 0.0
  %850 = vmatmul.mubr.f32.gmra.mrb[0].mxu0 %v670
  %v851 = vpop.f32.mrb[0].mxu0
  %v852 = vadd.f32 %v748, %v851
  %v853 = vpop.f32.mrb[0].mxu0
  %854 = vmatprep.mubr.f32.mxu0 0.0
  %855 = vmatmul.mubr.f32.gmra.mrb[0].mxu0 %v671
  %v856 = vpop.f32.mrb[0].mxu0
  %v857 = vadd.f32 %v748, %v856
  %v858 = vpop.f32.mrb[0].mxu0
  %859 = vmatprep.mubr.f32.mxu0 0.0
  %860 = vmatmul.mubr.f32.gmra.mrb[0].mxu0 %v672
  %v861 = vpop.f32.mrb[0].mxu0
  %v862 = vadd.f32 %v748, %v861
  %v863 = vpop.f32.mrb[0].mxu0
  %864 = vmatprep.mubr.f32.mxu0 0.0
  %865 = vmatmul.mubr.f32.gmra.mrb[0].mxu0 %v673
  %v866 = vpop.f32.mrb[0].mxu0
  %v867 = vadd.f32 %v748, %v866
  %v868 = vpop.f32.mrb[0].mxu0
  %869 = vmatprep.mubr.f32.mxu0 0.0
  %870 = vmatmul.mubr.f32.gmra.mrb[0].mxu0 %v674
  %v871 = vpop.f32.mrb[0].mxu0
  %v872 = vadd.f32 %v748, %v871
  %v873 = vpop.f32.mrb[0].mxu0
  %874 = vmatprep.mubr.f32.mxu0 0.0
  %875 = vmatmul.mubr.f32.gmra.mrb[0].mxu0 %v675
  %v876 = vpop.f32.mrb[0].mxu0
  %v877 = vadd.f32 %v748, %v876
  %v878 = vpop.f32.mrb[0].mxu0
  %879 = vmatprep.mubr.f32.mxu0 0.0
  %880 = vmatmul.mubr.f32.gmra.mrb[0].mxu0 %v676
  %v881 = vpop.f32.mrb[0].mxu0
  %v882 = vadd.f32 %v748, %v881
  %v883 = vpop.f32.mrb[0].mxu0
  %884 = vmatprep.mubr.f32.mxu0 0.0
  %885 = vmatmul.mubr.f32.gmra.mrb[0].mxu0 %v677
  %v886 = vpop.f32.mrb[0].mxu0
  %v887 = vadd.f32 %v748, %v886
  %v888 = vpop.f32.mrb[0].mxu0
  %889 = vmatprep.mubr.f32.mxu0 0.0
  %890 = vmatmul.mubr.f32.gmra.mrb[0].mxu0 %v678
  %v891 = vpop.f32.mrb[0].mxu0
  %v892 = vadd.f32 %v748, %v891
  %v893 = vpop.f32.mrb[0].mxu0
  %894 = vmatprep.mubr.f32.mxu0 0.0
  %895 = vmatmul.mubr.f32.gmra.mrb[0].mxu0 %v679
  %v896 = vpop.f32.mrb[0].mxu0
  %v897 = vadd.f32 %v748, %v896
  %v898 = vpop.f32.mrb[0].mxu0
  %899 = vmatprep.mubr.f32.mxu0 0.0
  %900 = vmatmul.mubr.f32.gmra.mrb[0].mxu0 %v680
  %v901 = vpop.f32.mrb[0].mxu0
  %v902 = vadd.f32 %v748, %v901
  %v903 = vpop.f32.mrb[0].mxu0
  %904 = vmatprep.mubr.f32.mxu0 0.0
  %905 = vmatmul.mubr.f32.gmra.mrb[0].mxu0 %v681
  %v906 = vpop.f32.mrb[0].mxu0
  %v907 = vadd.f32 %v748, %v906
  %v908 = vpop.f32.mrb[0].mxu0
  %909 = vmatprep.mubr.f32.mxu0 0.0
  %910 = vmatmul.mubr.f32.gmra.mrb[0].mxu0 %v682
  %v911 = vpop.f32.mrb[0].mxu0
  %v912 = vadd.f32 %v748, %v911
  %v913 = vpop.f32.mrb[0].mxu0
  %914 = vmatprep.mubr.f32.mxu0 0.0
  %915 = vmatmul.mubr.f32.gmra.mrb[0].mxu0 %v683
  %v916 = vpop.f32.mrb[0].mxu0
  %v917 = vadd.f32 %v748, %v916
  %v918 = vpop.f32.mrb[0].mxu0
  %919 = vmatprep.mubr.f32.mxu0 0.0
  %920 = vmatmul.mubr.f32.gmra.mrb[0].mxu0 %v684
  %v921 = vpop.f32.mrb[0].mxu0
  %v922 = vadd.f32 %v748, %v921
  %v923 = vpop.f32.mrb[0].mxu0
  %924 = vmatprep.mubr.f32.mxu0 0.0
  %925 = vmatmul.mubr.f32.gmra.mrb[0].mxu0 %v685
  %v926 = vpop.f32.mrb[0].mxu0
  %v927 = vadd.f32 %v748, %v926
  %v928 = vpop.f32.mrb[0].mxu0
  %929 = vmatprep.mubr.f32.mxu0 0.0
  %930 = vmatmul.mubr.f32.gmra.mrb[0].mxu0 %v686
  %v931 = vpop.f32.mrb[0].mxu0
  %v932 = vadd.f32 %v748, %v931
  %v933 = vpop.f32.mrb[0].mxu0
  %934 = vmatprep.mubr.f32.mxu0 0.0
  %935 = vmatmul.mubr.f32.gmra.mrb[0].mxu0 %v687
  %v936 = vpop.f32.mrb[0].mxu0
  %v937 = vadd.f32 %v748, %v936
  %v938 = vpop.f32.mrb[0].mxu0
  %939 = vmatprep.mubr.f32.mxu0 0.0
  %940 = vmatmul.mubr.f32.gmra.mrb[0].mxu0 %v688
  %v941 = vpop.f32.mrb[0].mxu0
  %v942 = vadd.f32 %v748, %v941
  %v943 = vpop.f32.mrb[0].mxu0
  %944 = vmatprep.mubr.f32.mxu0 0.0
  %945 = vmatmul.mubr.f32.gmra.mrb[0].mxu0 %v689
  %v946 = vpop.f32.mrb[0].mxu0
  %v947 = vadd.f32 %v748, %v946
  %v948 = vpop.f32.mrb[0].mxu0
  %949 = vmatprep.mubr.f32.mxu0 0.0
  %950 = vmatmul.mubr.f32.gmra.mrb[0].mxu0 %v690
  %v951 = vpop.f32.mrb[0].mxu0
  %v952 = vadd.f32 %v748, %v951
  %v953 = vpop.f32.mrb[0].mxu0
  %954 = vmatprep.mubr.f32.mxu0 0.0
  %955 = vmatmul.mubr.f32.gmra.mrb[0].mxu0 %v691
  %v956 = vpop.f32.mrb[0].mxu0
  %v957 = vadd.f32 %v748, %v956
  %v958 = vpop.f32.mrb[0].mxu0
  %959 = vmatprep.mubr.f32.mxu0 0.0
  %960 = vmatmul.mubr.f32.gmra.mrb[0].mxu0 %v692
  %v961 = vpop.f32.mrb[0].mxu0
  %v962 = vadd.f32 %v748, %v961
  %v963 = vpop.f32.mrb[0].mxu0
  %964 = vmatprep.mubr.f32.mxu0 0.0
  %965 = vmatmul.mubr.f32.gmra.mrb[0].mxu0 %v693
  %v966 = vpop.f32.mrb[0].mxu0
  %v967 = vadd.f32 %v748, %v966
  %v968 = vpop.f32.mrb[0].mxu0
  %969 = vmatprep.mubr.f32.mxu0 0.0
  %970 = vmatmul.mubr.f32.gmra.mrb[0].mxu0 %v694
  %v971 = vpop.f32.mrb[0].mxu0
  %v972 = vadd.f32 %v748, %v971
  %v973 = vpop.f32.mrb[0].mxu0
  %974 = vmatprep.mubr.f32.mxu0 0.0
  %975 = vmatmul.mubr.f32.gmra.mrb[0].mxu0 %v695
  %v976 = vpop.f32.mrb[0].mxu0
  %v977 = vadd.f32 %v748, %v976
  %v978 = vpop.f32.mrb[0].mxu0
  %979 = vmatprep.mubr.f32.mxu0 0.0
  %980 = vmatmul.mubr.f32.gmra.mrb[0].mxu0 %v696
  %v981 = vpop.f32.mrb[0].mxu0
  %v982 = vadd.f32 %v748, %v981
  %v983 = vpop.f32.mrb[0].mxu0
  %984 = vmatprep.mubr.f32.mxu0 0.0
  %985 = vmatmul.mubr.f32.gmra.mrb[0].mxu0 %v697
  %v986 = vpop.f32.mrb[0].mxu0
  %v987 = vadd.f32 %v748, %v986
  %v988 = vpop.f32.mrb[0].mxu0
  %989 = vmatprep.mubr.f32.mxu0 0.0
  %990 = vmatmul.mubr.f32.gmra.mrb[0].mxu0 %v698
  %v991 = vpop.f32.mrb[0].mxu0
  %v992 = vadd.f32 %v748, %v991
  %v993 = vpop.f32.mrb[0].mxu0
  %994 = vmatprep.mubr.f32.mxu0 0.0
  %995 = vmatmul.mubr.f32.gmra.mrb[0].mxu0 %v699
  %v996 = vpop.f32.mrb[0].mxu0
  %v997 = vadd.f32 %v748, %v996
  %v998 = vpop.f32.mrb[0].mxu0
  %999 = vmatprep.mubr.f32.mxu0 0.0
  %1000 = vmatmul.mubr.f32.gmra.mrb[0].mxu0 %v700
  %v1001 = vpop.f32.mrb[0].mxu0
  %v1002 = vadd.f32 %v748, %v1001
  %v1003 = vpop.f32.mrb[0].mxu0
  %1004 = vmatprep.mubr.f32.mxu0 0.0
  %1005 = vmatmul.mubr.f32.gmra.mrb[0].mxu0 %v701
  %v1006 = vpop.f32.mrb[0].mxu0
  %v1007 = vadd.f32 %v748, %v1006
  %v1008 = vpop.f32.mrb[0].mxu0
  %1009 = vmatprep.mubr.f32.mxu0 0.0
  %1010 = vmatmul.mubr.f32.gmra.mrb[0].mxu0 %v702
  %v1011 = vpop.f32.mrb[0].mxu0
  %v1012 = vadd.f32 %v748, %v1011
  %v1013 = vpop.f32.mrb[0].mxu0
  %1014 = vmatprep.mubr.f32.mxu0 0.0
  %1015 = vmatmul.mubr.f32.gmra.mrb[0].mxu0 %v703
  %v1016 = vpop.f32.mrb[0].mxu0
  %v1017 = vadd.f32 %v748, %v1016
  %v1018 = vpop.f32.mrb[0].mxu0
  %1019 = vmatprep.mubr.f32.mxu0 0.0
  %1020 = vmatmul.mubr.f32.gmra.mrb[0].mxu0 %v704
  %v1021 = vpop.f32.mrb[0].mxu0
  %v1022 = vadd.f32 %v748, %v1021
  %v1023 = vpop.f32.mrb[0].mxu0
  %1024 = vmatprep.mubr.f32.mxu0 0.0
  %1025 = vmatmul.mubr.f32.gmra.mrb[0].mxu0 %v705
  %v1026 = vpop.f32.mrb[0].mxu0
  %v1027 = vadd.f32 %v748, %v1026
  %v1028 = vpop.f32.mrb[0].mxu0
  %1029 = vmatprep.mubr.f32.mxu0 0.0
  %1030 = vmatmul.mubr.f32.gmra.mrb[0].mxu0 %v706
  %v1031 = vpop.f32.mrb[0].mxu0
  %v1032 = vadd.f32 %v748, %v1031
  %v1033 = vpop.f32.mrb[0].mxu0
  %1034 = vmatprep.mubr.f32.mxu0 0.0
  %1035 = vmatmul.mubr.f32.gmra.mrb[0].mxu0 %v707
  %v1036 = vpop.f32.mrb[0].mxu0
  %v1037 = vadd.f32 %v748, %v1036
  %v1038 = vpop.f32.mrb[0].mxu0
  %1039 = vmatprep.mubr.f32.mxu0 0.0
  %1040 = vmatmul.mubr.f32.gmra.mrb[0].mxu0 %v708
  %v1041 = vpop.f32.mrb[0].mxu0
  %v1042 = vadd.f32 %v748, %v1041
  %v1043 = vpop.f32.mrb[0].mxu0
  %1044 = vmatprep.mubr.f32.mxu0 0.0
  %1045 = vmatmul.mubr.f32.gmra.mrb[0].mxu0 %v709
  %v1046 = vpop.f32.mrb[0].mxu0
  %v1047 = vadd.f32 %v748, %v1046
  %v1048 = vpop.f32.mrb[0].mxu0
  %1049 = vmatprep.mubr.f32.mxu0 0.0
  %1050 = vmatmul.mubr.f32.gmra.mrb[0].mxu0 %v710
  %v1051 = vpop.f32.mrb[0].mxu0
  %v1052 = vadd.f32 %v748, %v1051
  %v1053 = vpop.f32.mrb[0].mxu0
  %1054 = vmatprep.mubr.f32.mxu0 0.0
  %1055 = vmatmul.mubr.f32.gmra.mrb[0].mxu0 %v711
  %v1056 = vpop.f32.mrb[0].mxu0
  %v1057 = vadd.f32 %v748, %v1056
  %v1058 = vpop.f32.mrb[0].mxu0
  %1059 = vmatprep.mubr.f32.mxu0 0.0
  %1060 = vmatmul.mubr.f32.gmra.mrb[0].mxu0 %v712
  %v1061 = vpop.f32.mrb[0].mxu0
  %v1062 = vadd.f32 %v748, %v1061
  %v1063 = vpop.f32.mrb[0].mxu0
  %1064 = vmatprep.mubr.f32.mxu0 0.0
  %1065 = vmatmul.mubr.f32.gmra.mrb[0].mxu0 %v713
  %v1066 = vpop.f32.mrb[0].mxu0
  %v1067 = vadd.f32 %v748, %v1066
  %v1068 = vpop.f32.mrb[0].mxu0
  %1069 = vmatprep.mubr.f32.mxu0 0.0
  %1070 = vmatmul.mubr.f32.gmra.mrb[0].mxu0 %v714
  %v1071 = vpop.f32.mrb[0].mxu0
  %v1072 = vadd.f32 %v748, %v1071
  %v1073 = vpop.f32.mrb[0].mxu0
  %1074 = vmatprep.mubr.f32.mxu0 0.0
  %1075 = vmatmul.mubr.f32.gmra.mrb[0].mxu0 %v715
  %v1076 = vpop.f32.mrb[0].mxu0
  %v1077 = vadd.f32 %v748, %v1076
  %v1078 = vpop.f32.mrb[0].mxu0
  %1079 = vmatprep.mubr.f32.mxu0 0.0
  %1080 = vmatmul.mubr.f32.gmra.mrb[0].mxu0 %v716
  %v1081 = vpop.f32.mrb[0].mxu0
  %v1082 = vadd.f32 %v748, %v1081
  %v1083 = vpop.f32.mrb[0].mxu0
  %1084 = vmatprep.mubr.f32.mxu0 0.0
  %1085 = vmatmul.mubr.f32.gmra.mrb[0].mxu0 %v717
  %v1086 = vpop.f32.mrb[0].mxu0
  %v1087 = vadd.f32 %v748, %v1086
  %v1088 = vpop.f32.mrb[0].mxu0
  %1089 = vmatprep.mubr.f32.mxu0 0.0
  %1090 = vmatmul.mubr.f32.gmra.mrb[0].mxu0 %v718
  %v1091 = vpop.f32.mrb[0].mxu0
  %v1092 = vadd.f32 %v748, %v1091
  %v1093 = vpop.f32.mrb[0].mxu0
  %1094 = vmatprep.mubr.f32.mxu0 0.0
  %1095 = vmatmul.mubr.f32.gmra.mrb[0].mxu0 %v719
  %v1096 = vpop.f32.mrb[0].mxu0
  %v1097 = vadd.f32 %v748, %v1096
  %v1098 = vpop.f32.mrb[0].mxu0
  %1099 = vmatprep.mubr.f32.mxu0 0.0
  %1100 = vmatmul.mubr.f32.gmra.mrb[0].mxu0 %v720
  %v1101 = vpop.f32.mrb[0].mxu0
  %v1102 = vadd.f32 %v748, %v1101
  %v1103 = vpop.f32.mrb[0].mxu0
  %1104 = vmatprep.mubr.f32.mxu0 0.0
  %1105 = vmatmul.mubr.f32.gmra.mrb[0].mxu0 %v721
  %v1106 = vpop.f32.mrb[0].mxu0
  %v1107 = vadd.f32 %v748, %v1106
  %v1108 = vpop.f32.mrb[0].mxu0
  %1109 = vmatprep.mubr.f32.mxu0 0.0
  %1110 = vmatmul.mubr.f32.gmra.mrb[0].mxu0 %v722
  %v1111 = vpop.f32.mrb[0].mxu0
  %v1112 = vadd.f32 %v748, %v1111
  %v1113 = vpop.f32.mrb[0].mxu0
  %1114 = vmatprep.mubr.f32.mxu0 0.0
  %1115 = vmatmul.mubr.f32.gmra.mrb[0].mxu0 %v723
  %v1116 = vpop.f32.mrb[0].mxu0
  %v1117 = vadd.f32 %v748, %v1116
  %v1118 = vpop.f32.mrb[0].mxu0
  %1119 = vmatprep.mubr.f32.mxu0 0.0
  %1120 = vmatmul.mubr.f32.gmra.mrb[0].mxu0 %v724
  %v1121 = vpop.f32.mrb[0].mxu0
  %v1122 = vadd.f32 %v748, %v1121
  %v1123 = vpop.f32.mrb[0].mxu0
  %1124 = vmatprep.mubr.f32.mxu0 0.0
  %1125 = vmatmul.mubr.f32.gmra.mrb[0].mxu0 %v725
  %v1126 = vpop.f32.mrb[0].mxu0
  %v1127 = vadd.f32 %v748, %v1126
  %v1128 = vpop.f32.mrb[0].mxu0
  %1129 = vmatprep.mubr.f32.mxu0 0.0
  %1130 = vmatmul.mubr.f32.gmra.mrb[0].mxu0 %v726
  %v1131 = vpop.f32.mrb[0].mxu0
  %v1132 = vadd.f32 %v748, %v1131
  %v1133 = vpop.f32.mrb[0].mxu0
  %1134 = vdwg.mxu0
  %v1135 = vmax.f32 %v817, 0.0
  %v1136 = vmax.f32 %v822, 0.0
  %v1137 = vmax.f32 %v827, 0.0
  %v1138 = vmax.f32 %v832, 0.0
  %v1139 = vmax.f32 %v837, 0.0
  %v1140 = vmax.f32 %v842, 0.0
  %v1141 = vmax.f32 %v847, 0.0
  %v1142 = vmax.f32 %v852, 0.0
  %v1143 = vmax.f32 %v857, 0.0
  %v1144 = vmax.f32 %v862, 0.0
  %v1145 = vmax.f32 %v867, 0.0
  %v1146 = vmax.f32 %v872, 0.0
  %v1147 = vmax.f32 %v877, 0.0
  %v1148 = vmax.f32 %v882, 0.0
  %v1149 = vmax.f32 %v887, 0.0
  %v1150 = vmax.f32 %v892, 0.0
  %v1151 = vmax.f32 %v897, 0.0
  %v1152 = vmax.f32 %v902, 0.0
  %v1153 = vmax.f32 %v907, 0.0
  %v1154 = vmax.f32 %v912, 0.0
  %v1155 = vmax.f32 %v917, 0.0
  %v1156 = vmax.f32 %v922, 0.0
  %v1157 = vmax.f32 %v927, 0.0
  %v1158 = vmax.f32 %v932, 0.0
  %v1159 = vmax.f32 %v937, 0.0
  %v1160 = vmax.f32 %v942, 0.0
  %v1161 = vmax.f32 %v947, 0.0
  %v1162 = vmax.f32 %v952, 0.0
  %v1163 = vmax.f32 %v957, 0.0
  %v1164 = vmax.f32 %v962, 0.0
  %v1165 = vmax.f32 %v967, 0.0
  %v1166 = vmax.f32 %v972, 0.0
  %v1167 = vmax.f32 %v977, 0.0
  %v1168 = vmax.f32 %v982, 0.0
  %v1169 = vmax.f32 %v987, 0.0
  %v1170 = vmax.f32 %v992, 0.0
  %v1171 = vmax.f32 %v997, 0.0
  %v1172 = vmax.f32 %v1002, 0.0
  %v1173 = vmax.f32 %v1007, 0.0
  %v1174 = vmax.f32 %v1012, 0.0
  %v1175 = vmax.f32 %v1017, 0.0
  %v1176 = vmax.f32 %v1022, 0.0
  %v1177 = vmax.f32 %v1027, 0.0
  %v1178 = vmax.f32 %v1032, 0.0
  %v1179 = vmax.f32 %v1037, 0.0
  %v1180 = vmax.f32 %v1042, 0.0
  %v1181 = vmax.f32 %v1047, 0.0
  %v1182 = vmax.f32 %v1052, 0.0
  %v1183 = vmax.f32 %v1057, 0.0
  %v1184 = vmax.f32 %v1062, 0.0
  %v1185 = vmax.f32 %v1067, 0.0
  %v1186 = vmax.f32 %v1072, 0.0
  %v1187 = vmax.f32 %v1077, 0.0
  %v1188 = vmax.f32 %v1082, 0.0
  %v1189 = vmax.f32 %v1087, 0.0
  %v1190 = vmax.f32 %v1092, 0.0
  %v1191 = vmax.f32 %v1097, 0.0
  %v1192 = vmax.f32 %v1102, 0.0
  %v1193 = vmax.f32 %v1107, 0.0
  %v1194 = vmax.f32 %v1112, 0.0
  %v1195 = vmax.f32 %v1117, 0.0
  %v1196 = vmax.f32 %v1122, 0.0
  %v1197 = vmax.f32 %v1127, 0.0
  %v1198 = vmax.f32 %v1132, 0.0
  %v1199 = vld [vmem:[%s5] sm:$0xff]
  %v1200 = vld [vmem:[%s6] sm:$0xff]
  %1202 = vset.pattern.permute.xlu0 0
  %1203 = vperm.xlu0 %1202, %v1200
  %v1204 = vpop.permute.xlu0 %1203
  %vm1206 = vcmask 523264
  %v1208 = vsel %vm1206, %v1199, 0
  %v1211 = vsel %vm1206, %v1135, 0
  %v1214 = vsel %vm1206, %v1136, 0
  %v1217 = vsel %vm1206, %v1137, 0
  %v1220 = vsel %vm1206, %v1138, 0
  %v1223 = vsel %vm1206, %v1139, 0
  %v1226 = vsel %vm1206, %v1140, 0
  %v1229 = vsel %vm1206, %v1141, 0
  %v1232 = vsel %vm1206, %v1142, 0
  %v1235 = vsel %vm1206, %v1143, 0
  %v1238 = vsel %vm1206, %v1144, 0
  %v1241 = vsel %vm1206, %v1145, 0
  %v1244 = vsel %vm1206, %v1146, 0
  %v1247 = vsel %vm1206, %v1147, 0
  %v1250 = vsel %vm1206, %v1148, 0
  %v1253 = vsel %vm1206, %v1149, 0
  %v1256 = vsel %vm1206, %v1150, 0
  %v1259 = vsel %vm1206, %v1151, 0
  %v1262 = vsel %vm1206, %v1152, 0
  %v1265 = vsel %vm1206, %v1153, 0
  %v1268 = vsel %vm1206, %v1154, 0
  %v1271 = vsel %vm1206, %v1155, 0
  %v1274 = vsel %vm1206, %v1156, 0
  %v1277 = vsel %vm1206, %v1157, 0
  %v1280 = vsel %vm1206, %v1158, 0
  %v1283 = vsel %vm1206, %v1159, 0
  %v1286 = vsel %vm1206, %v1160, 0
  %v1289 = vsel %vm1206, %v1161, 0
  %v1292 = vsel %vm1206, %v1162, 0
  %v1295 = vsel %vm1206, %v1163, 0
  %v1298 = vsel %vm1206, %v1164, 0
  %v1301 = vsel %vm1206, %v1165, 0
  %v1304 = vsel %vm1206, %v1166, 0
  %v1307 = vsel %vm1206, %v1167, 0
  %v1310 = vsel %vm1206, %v1168, 0
  %v1313 = vsel %vm1206, %v1169, 0
  %v1316 = vsel %vm1206, %v1170, 0
  %v1319 = vsel %vm1206, %v1171, 0
  %v1322 = vsel %vm1206, %v1172, 0
  %v1325 = vsel %vm1206, %v1173, 0
  %v1328 = vsel %vm1206, %v1174, 0
  %v1331 = vsel %vm1206, %v1175, 0
  %v1334 = vsel %vm1206, %v1176, 0
  %v1337 = vsel %vm1206, %v1177, 0
  %v1340 = vsel %vm1206, %v1178, 0
  %v1343 = vsel %vm1206, %v1179, 0
  %v1346 = vsel %vm1206, %v1180, 0
  %v1349 = vsel %vm1206, %v1181, 0
  %v1352 = vsel %vm1206, %v1182, 0
  %v1355 = vsel %vm1206, %v1183, 0
  %v1358 = vsel %vm1206, %v1184, 0
  %v1361 = vsel %vm1206, %v1185, 0
  %v1364 = vsel %vm1206, %v1186, 0
  %v1367 = vsel %vm1206, %v1187, 0
  %v1370 = vsel %vm1206, %v1188, 0
  %v1373 = vsel %vm1206, %v1189, 0
  %v1376 = vsel %vm1206, %v1190, 0
  %v1379 = vsel %vm1206, %v1191, 0
  %v1382 = vsel %vm1206, %v1192, 0
  %v1385 = vsel %vm1206, %v1193, 0
  %v1388 = vsel %vm1206, %v1194, 0
  %v1391 = vsel %vm1206, %v1195, 0
  %v1394 = vsel %vm1206, %v1196, 0
  %v1397 = vsel %vm1206, %v1197, 0
  %v1400 = vsel %vm1206, %v1198, 0
  %1402 = vmatprep.subr.mxu0 0.0
  %1403 = vmatpush1.xpose.msra.mxu0 %v1211
  %1404 = vmatprep.subr.mxu0 0.0
  %1405 = vmatpush1.xpose.msra.mxu0 %v1214
  %1406 = vmatprep.subr.mxu0 0.0
  %1407 = vmatpush1.xpose.msra.mxu0 %v1217
  %1408 = vmatprep.subr.mxu0 0.0
  %1409 = vmatpush1.xpose.msra.mxu0 %v1220
  %1410 = vmatprep.subr.mxu0 0.0
  %1411 = vmatpush1.xpose.msra.mxu0 %v1223
  %1412 = vmatprep.subr.mxu0 0.0
  %1413 = vmatpush1.xpose.msra.mxu0 %v1226
  %1414 = vmatprep.subr.mxu0 0.0
  %1415 = vmatpush1.xpose.msra.mxu0 %v1229
  %1416 = vmatprep.subr.mxu0 0.0
  %1417 = vmatpush1.xpose.msra.mxu0 %v1232
  %1418 = vmatprep.subr.mxu0 0.0
  %1419 = vmatpush1.xpose.msra.mxu0 %v1235
  %1420 = vmatprep.subr.mxu0 0.0
  %1421 = vmatpush1.xpose.msra.mxu0 %v1238
  %1422 = vmatprep.subr.mxu0 0.0
  %1423 = vmatpush1.xpose.msra.mxu0 %v1241
  %1424 = vmatprep.subr.mxu0 0.0
  %1425 = vmatpush1.xpose.msra.mxu0 %v1244
  %1426 = vmatprep.subr.mxu0 0.0
  %1427 = vmatpush1.xpose.msra.mxu0 %v1247
  %1428 = vmatprep.subr.mxu0 0.0
  %1429 = vmatpush1.xpose.msra.mxu0 %v1250
  %1430 = vmatprep.subr.mxu0 0.0
  %1431 = vmatpush1.xpose.msra.mxu0 %v1253
  %1432 = vmatprep.subr.mxu0 0.0
  %1433 = vmatpush1.xpose.msra.mxu0 %v1256
  %1434 = vmatprep.subr.mxu0 0.0
  %1435 = vmatpush1.xpose.msra.mxu0 %v1259
  %1436 = vmatprep.subr.mxu0 0.0
  %1437 = vmatpush1.xpose.msra.mxu0 %v1262
  %1438 = vmatprep.subr.mxu0 0.0
  %1439 = vmatpush1.xpose.msra.mxu0 %v1265
  %1440 = vmatprep.subr.mxu0 0.0
  %1441 = vmatpush1.xpose.msra.mxu0 %v1268
  %1442 = vmatprep.subr.mxu0 0.0
  %1443 = vmatpush1.xpose.msra.mxu0 %v1271
  %1444 = vmatprep.subr.mxu0 0.0
  %1445 = vmatpush1.xpose.msra.mxu0 %v1274
  %1446 = vmatprep.subr.mxu0 0.0
  %1447 = vmatpush1.xpose.msra.mxu0 %v1277
  %1448 = vmatprep.subr.mxu0 0.0
  %1449 = vmatpush1.xpose.msra.mxu0 %v1280
  %1450 = vmatprep.subr.mxu0 0.0
  %1451 = vmatpush1.xpose.msra.mxu0 %v1283
  %1452 = vmatprep.subr.mxu0 0.0
  %1453 = vmatpush1.xpose.msra.mxu0 %v1286
  %1454 = vmatprep.subr.mxu0 0.0
  %1455 = vmatpush1.xpose.msra.mxu0 %v1289
  %1456 = vmatprep.subr.mxu0 0.0
  %1457 = vmatpush1.xpose.msra.mxu0 %v1292
  %1458 = vmatprep.subr.mxu0 0.0
  %1459 = vmatpush1.xpose.msra.mxu0 %v1295
  %1460 = vmatprep.subr.mxu0 0.0
  %1461 = vmatpush1.xpose.msra.mxu0 %v1298
  %1462 = vmatprep.subr.mxu0 0.0
  %1463 = vmatpush1.xpose.msra.mxu0 %v1301
  %1464 = vmatprep.subr.mxu0 0.0
  %1465 = vmatpush1.xpose.msra.mxu0 %v1304
  %1466 = vmatprep.mubr.f32.mxu0 0.0
  %1467 = vmatmul.mubr.f32.gmra.mrb[0].mxu0 %v1208
  %v1468 = vpop.f32.mrb[0].mxu0
  %v1469 = vadd.f32 %v1204, %v1468
  %v1470 = vpop.f32.mrb[0].mxu0
  %v1471 = vadd.f32 %v1204, %v1470
  %1472 = vdwg.mxu0
  %1473 = vmatprep.subr.mxu0 0.0
  %1474 = vmatpush1.xpose.msra.mxu0 %v1307
  %1475 = vmatprep.subr.mxu0 0.0
  %1476 = vmatpush1.xpose.msra.mxu0 %v1310
  %1477 = vmatprep.subr.mxu0 0.0
  %1478 = vmatpush1.xpose.msra.mxu0 %v1313
  %1479 = vmatprep.subr.mxu0 0.0
  %1480 = vmatpush1.xpose.msra.mxu0 %v1316
  %1481 = vmatprep.subr.mxu0 0.0
  %1482 = vmatpush1.xpose.msra.mxu0 %v1319
  %1483 = vmatprep.subr.mxu0 0.0
  %1484 = vmatpush1.xpose.msra.mxu0 %v1322
  %1485 = vmatprep.subr.mxu0 0.0
  %1486 = vmatpush1.xpose.msra.mxu0 %v1325
  %1487 = vmatprep.subr.mxu0 0.0
  %1488 = vmatpush1.xpose.msra.mxu0 %v1328
  %1489 = vmatprep.subr.mxu0 0.0
  %1490 = vmatpush1.xpose.msra.mxu0 %v1331
  %1491 = vmatprep.subr.mxu0 0.0
  %1492 = vmatpush1.xpose.msra.mxu0 %v1334
  %1493 = vmatprep.subr.mxu0 0.0
  %1494 = vmatpush1.xpose.msra.mxu0 %v1337
  %1495 = vmatprep.subr.mxu0 0.0
  %1496 = vmatpush1.xpose.msra.mxu0 %v1340
  %1497 = vmatprep.subr.mxu0 0.0
  %1498 = vmatpush1.xpose.msra.mxu0 %v1343
  %1499 = vmatprep.subr.mxu0 0.0
  %1500 = vmatpush1.xpose.msra.mxu0 %v1346
  %1501 = vmatprep.subr.mxu0 0.0
  %1502 = vmatpush1.xpose.msra.mxu0 %v1349
  %1503 = vmatprep.subr.mxu0 0.0
  %1504 = vmatpush1.xpose.msra.mxu0 %v1352
  %1505 = vmatprep.subr.mxu0 0.0
  %1506 = vmatpush1.xpose.msra.mxu0 %v1355
  %1507 = vmatprep.subr.mxu0 0.0
  %1508 = vmatpush1.xpose.msra.mxu0 %v1358
  %1509 = vmatprep.subr.mxu0 0.0
  %1510 = vmatpush1.xpose.msra.mxu0 %v1361
  %1511 = vmatprep.subr.mxu0 0.0
  %1512 = vmatpush1.xpose.msra.mxu0 %v1364
  %1513 = vmatprep.subr.mxu0 0.0
  %1514 = vmatpush1.xpose.msra.mxu0 %v1367
  %1515 = vmatprep.subr.mxu0 0.0
  %1516 = vmatpush1.xpose.msra.mxu0 %v1370
  %1517 = vmatprep.subr.mxu0 0.0
  %1518 = vmatpush1.xpose.msra.mxu0 %v1373
  %1519 = vmatprep.subr.mxu0 0.0
  %1520 = vmatpush1.xpose.msra.mxu0 %v1376
  %1521 = vmatprep.subr.mxu0 0.0
  %1522 = vmatpush1.xpose.msra.mxu0 %v1379
  %1523 = vmatprep.subr.mxu0 0.0
  %1524 = vmatpush1.xpose.msra.mxu0 %v1382
  %1525 = vmatprep.subr.mxu0 0.0
  %1526 = vmatpush1.xpose.msra.mxu0 %v1385
  %1527 = vmatprep.subr.mxu0 0.0
  %1528 = vmatpush1.xpose.msra.mxu0 %v1388
  %1529 = vmatprep.subr.mxu0 0.0
  %1530 = vmatpush1.xpose.msra.mxu0 %v1391
  %1531 = vmatprep.subr.mxu0 0.0
  %1532 = vmatpush1.xpose.msra.mxu0 %v1394
  %1533 = vmatprep.subr.mxu0 0.0
  %1534 = vmatpush1.xpose.msra.mxu0 %v1397
  %1535 = vmatprep.subr.mxu0 0.0
  %1536 = vmatpush1.xpose.msra.mxu0 %v1400
  %1537 = vmatprep.mubr.f32.mxu0 0.0
  %1538 = vmatmul.mubr.f32.gmra.mrb[0].mxu0 %v1208
  %v1539 = vpop.f32.mrb[0].mxu0
  %v1540 = vadd.f32 %v1204, %v1539
  %v1541 = vpop.f32.mrb[0].mxu0
  %v1542 = vadd.f32 %v1204, %v1541
  %1543 = vdwg.mxu0
  %1544 = vst [vmem:[%s7] sm:$0xff] %v1469
  %1545 = vst [vmem:[%s7 + $0x8] sm:$0xff] %v1471
  %1546 = vst [vmem:[%s7 + $0x10] sm:$0xff] %v1540
  %1547 = vst [vmem:[%s7 + $0x18] sm:$0xff] %v1542
  // Predicated region
  $region30: #{siamese_simple_forward.1} parent=0 // pred_check
    _
  $region31: #{siamese_simple_forward.1} parent=0 // pred_check_branch
    %1549 = sbr.rel (0) target = $region33
  $region32: #{siamese_simple_forward.1} parent=0 // pred_region
    _
  $region33: #{siamese_simple_forward.1} parent=0 // pred_fallthru
    _
  // Predicated region
  $region34: #{siamese_simple_forward.1} parent=0 // pred_check
    _
  $region35: #{siamese_simple_forward.1} parent=0 // pred_check_branch
    %1551 = sbr.rel (0) target = $region37
  $region36: #{siamese_simple_forward.1} parent=0 // pred_region
    _
  $region37: #{siamese_simple_forward.1} parent=0 // pred_fallthru
    _

</llo_original>
